<compile_context>
chip_gen: v7x
topology: tpu7x:2x2x1
jax: 0.10.0
libtpu: 0.0.40
codegen_flags: <defaults>
</compile_context>

<pallas_src>
import functools

import jax
import jax.numpy as jnp
from jax.experimental import pallas as pl
from jax.experimental.pallas import tpu as pltpu

IN_FEATURES = 512
HID_FEATURES = 326   # logical hidden width (out of first Linear)
HID_PADDED = 384     # 3 * 128: lane-dense padded hidden width
OUT_FEATURES = 128
NEG_SLOPE = 0.01     # torch.nn.LeakyReLU default


def _round_up(n, m):
    return ((n + m - 1) // m) * m


def mlp_kernel(x_ref, w1_ref, b1_ref, w2_ref, b2_ref, o_ref):
    x = x_ref[...]                                        # (TB, 512)  f32
    h = jnp.dot(x, w1_ref[...],
                preferred_element_type=jnp.float32)       # (TB, 384)  MXU
    h = h + b1_ref[...]                                   # broadcast (1, 384)
    h = jnp.where(h > 0, h, NEG_SLOPE * h)                # LeakyReLU #1
    z = jnp.dot(h, w2_ref[...],
                preferred_element_type=jnp.float32)       # (TB, 128)  MXU
    z = z + b2_ref[...]                                   # broadcast (1, 128)
    # LeakyReLU followed by ReLU is exactly ReLU -> single clamp.
    o_ref[...] = jnp.maximum(z, 0.0)


def prepare_params(w1, b1, w2, b2):
    """One-time parameter prep: pad hidden dim 326 -> 384 with exact zeros.

    Zero w1 columns -> zero h lanes -> LeakyReLU(0)=0 -> zero w2 rows
    contribute 0, so the padded math is bit-identical to the 326-wide math.
    Call once per parameter set, NOT per forward.
    """
    pad_h = HID_PADDED - HID_FEATURES
    w1p = jnp.pad(w1, ((0, 0), (0, pad_h)))               # (512, 384)
    b1p = jnp.pad(b1, ((0, 0), (0, pad_h)))               # (1, 384)
    w2p = jnp.pad(w2, ((0, pad_h), (0, 0)))               # (384, 128)
    return w1p, b1p, w2p, b2


def _pick_batch_tile(B, block_b):
    """Batch tile: full-extent for tiny B; else >=2 grid steps, rows % 8 == 0."""
    if B <= 16:
        return B                       # single full-extent block (no 8-div rule)
    return min(block_b, _round_up(pl.cdiv(B, 2), 8))


@functools.partial(jax.jit, static_argnames=("block_b",))
def nba_forward(x, w1p, b1p, w2p, b2, *, block_b=1024):
    """x: (B, C, H, W) float32 with C*H*W == 512.  Returns (B, 128) float32.

    w1p: (512, 384)  b1p: (1, 384)  w2p: (384, 128)  b2: (1, 128)
    (pre-padded via `prepare_params`; weights stored transposed vs.
    torch.nn.Linear so the hot path is x @ W).
    """
    B = x.shape[0]
    x_flat = x.reshape(B, -1)                             # torch.nn.Flatten
    assert x_flat.shape[1] == IN_FEATURES, x_flat.shape

    tb = _pick_batch_tile(B, block_b)
    grid = (pl.cdiv(B, tb),)                              # partial tail masked

    flops = 2 * B * (IN_FEATURES * HID_PADDED + HID_PADDED * OUT_FEATURES)
    bytes_accessed = 4 * (
        B * (IN_FEATURES + OUT_FEATURES)
        + IN_FEATURES * HID_PADDED + HID_PADDED
        + HID_PADDED * OUT_FEATURES + OUT_FEATURES)

    # Constant index_map: weights/biases DMA'd once, VMEM-resident across steps.
    resident = lambda shape: pl.BlockSpec(shape, lambda i: (0, 0))

    out = pl.pallas_call(
        mlp_kernel,
        out_shape=jax.ShapeDtypeStruct((B, OUT_FEATURES), jnp.float32),
        grid=grid,
        in_specs=[
            pl.BlockSpec((tb, IN_FEATURES), lambda i: (i, 0)),   # x tile
            resident((IN_FEATURES, HID_PADDED)),                 # w1 (pinned)
            resident((1, HID_PADDED)),                           # b1 (pinned)
            resident((HID_PADDED, OUT_FEATURES)),                # w2 (pinned)
            resident((1, OUT_FEATURES)),                         # b2 (pinned)
        ],
        out_specs=pl.BlockSpec((tb, OUT_FEATURES), lambda i: (i, 0)),
        compiler_params=pltpu.CompilerParams(
            dimension_semantics=("parallel",),
            vmem_limit_bytes=32 << 20,
        ),
        cost_estimate=pl.CostEstimate(
            flops=flops, transcendentals=0, bytes_accessed=bytes_accessed),
    )(x_flat, w1p, b1p, w2p, b2)

    return out


def _init_params(key):
    """Deterministic parameter init (uniform, PyTorch-Linear-like bounds)."""
    k1, k2, k3, k4 = jax.random.split(key, 4)
    bound1 = 1.0 / (IN_FEATURES ** 0.5)
    bound2 = 1.0 / (HID_FEATURES ** 0.5)
    w1 = jax.random.uniform(k1, (IN_FEATURES, HID_FEATURES), jnp.float32,
                            -bound1, bound1)
    b1 = jax.random.uniform(k2, (1, HID_FEATURES), jnp.float32,
                            -bound1, bound1)
    w2 = jax.random.uniform(k3, (HID_FEATURES, OUT_FEATURES), jnp.float32,
                            -bound2, bound2)
    b2 = jax.random.uniform(k4, (1, OUT_FEATURES), jnp.float32,
                            -bound2, bound2)
    return w1, b1, w2, b2


if __name__ == "__main__":
    key = jax.random.PRNGKey(0)
    kx, kp = jax.random.split(key)

    # Input whose flatten yields 512 features: (B=2, C=2, H=16, W=16).
    x = jax.random.normal(kx, (2, 2, 16, 16), jnp.float32)
    w1, b1, w2, b2 = _init_params(kp)

    # One-time parameter prep (hoisted out of the forward).
    w1p, b1p, w2p, b2p = prepare_params(w1, b1, w2, b2)

    out = nba_forward(x, w1p, b1p, w2p, b2p)
    out = jax.block_until_ready(out)

    # Pure-JAX reference check (unpadded math).
    xf = x.reshape(x.shape[0], -1)
    h = xf @ w1 + b1
    h = jnp.where(h > 0, h, NEG_SLOPE * h)
    z = h @ w2 + b2
    ref = jnp.maximum(z, 0.0)   # relu(leaky_relu(z)) == relu(z)
    assert out.shape == (2, OUT_FEATURES), out.shape
    assert jnp.allclose(out, ref, atol=1e-5, rtol=1e-5)

    print("KERNEL_OK")
</pallas_src>

<mosaic_0001>
module attributes {stable_mosaic.version = 11 : i64} {
  func.func @mlp_kernel(%arg0: i32, %arg1: memref<2x512xf32, #tpu.memory_space<vmem>>, %arg2: memref<512x384xf32, #tpu.memory_space<vmem>>, %arg3: memref<1x384xf32, #tpu.memory_space<vmem>>, %arg4: memref<384x128xf32, #tpu.memory_space<vmem>>, %arg5: memref<1x128xf32, #tpu.memory_space<vmem>>, %arg6: memref<2x128xf32, #tpu.memory_space<vmem>>) attributes {dimension_semantics = [#tpu.dimension_semantics<parallel>], iteration_bounds = array<i64: 1>, scalar_prefetch = 0 : i64, scratch_operands = 0 : i64, tpu.core_type = #tpu.core_type<tc>, window_params = [{transform_indices = @transform_0, window_bounds = array<i64: 2, 512>}, {pipeline_mode = #tpu.pipeline_mode<synchronous>, transform_indices = @transform_1, window_bounds = array<i64: 512, 384>}, {pipeline_mode = #tpu.pipeline_mode<synchronous>, transform_indices = @transform_2, window_bounds = array<i64: 1, 384>}, {pipeline_mode = #tpu.pipeline_mode<synchronous>, transform_indices = @transform_3, window_bounds = array<i64: 384, 128>}, {pipeline_mode = #tpu.pipeline_mode<synchronous>, transform_indices = @transform_4, window_bounds = array<i64: 1, 128>}, {transform_indices = @transform_5, window_bounds = array<i64: 2, 128>}]} {
    %c0 = arith.constant 0 : index
    %c0_0 = arith.constant 0 : index
    %0 = vector.load %arg1[%c0, %c0_0] : memref<2x512xf32, #tpu.memory_space<vmem>>, vector<2x512xf32>
    %c0_1 = arith.constant 0 : index
    %c0_2 = arith.constant 0 : index
    %1 = vector.load %arg2[%c0_1, %c0_2] : memref<512x384xf32, #tpu.memory_space<vmem>>, vector<512x384xf32>
    %cst = arith.constant dense<0.000000e+00> : vector<2x384xf32>
    %2 = tpu.matmul %0, %1, %cst {dimension_numbers = #tpu.dot_dimension_numbers<[1], [0], [0], [1], [0, 0, 1, 1], [], []>} : vector<2x512xf32>, vector<512x384xf32>, vector<2x384xf32> -> vector<2x384xf32>
    %c0_3 = arith.constant 0 : index
    %c0_4 = arith.constant 0 : index
    %3 = vector.load %arg3[%c0_3, %c0_4] : memref<1x384xf32, #tpu.memory_space<vmem>>, vector<1x384xf32>
    %4 = vector.broadcast %3 : vector<1x384xf32> to vector<2x384xf32>
    %5 = arith.addf %2, %4 : vector<2x384xf32>
    %cst_5 = arith.constant 0.000000e+00 : f32
    %6 = vector.broadcast %cst_5 : f32 to vector<2x384xf32>
    %7 = arith.cmpf ogt, %5, %6 : vector<2x384xf32>
    %cst_6 = arith.constant 0.00999999977 : f32
    %8 = vector.broadcast %cst_6 : f32 to vector<2x384xf32>
    %9 = arith.mulf %8, %5 : vector<2x384xf32>
    %10 = arith.select %7, %5, %9 : vector<2x384xi1>, vector<2x384xf32>
    %c0_7 = arith.constant 0 : index
    %c0_8 = arith.constant 0 : index
    %11 = vector.load %arg4[%c0_7, %c0_8] : memref<384x128xf32, #tpu.memory_space<vmem>>, vector<384x128xf32>
    %cst_9 = arith.constant dense<0.000000e+00> : vector<2x128xf32>
    %12 = tpu.matmul %10, %11, %cst_9 {dimension_numbers = #tpu.dot_dimension_numbers<[1], [0], [0], [1], [0, 0, 1, 1], [], []>} : vector<2x384xf32>, vector<384x128xf32>, vector<2x128xf32> -> vector<2x128xf32>
    %c0_10 = arith.constant 0 : index
    %c0_11 = arith.constant 0 : index
    %13 = vector.load %arg5[%c0_10, %c0_11] : memref<1x128xf32, #tpu.memory_space<vmem>>, vector<1x128xf32>
    %14 = vector.broadcast %13 : vector<1x128xf32> to vector<2x128xf32>
    %15 = arith.addf %12, %14 : vector<2x128xf32>
    %cst_12 = arith.constant 0.000000e+00 : f32
    %16 = vector.broadcast %cst_12 : f32 to vector<2x128xf32>
    %17 = arith.maximumf %15, %16 : vector<2x128xf32>
    %c0_13 = arith.constant 0 : index
    %c0_14 = arith.constant 0 : index
    %18 = vector.load %arg6[%c0_13, %c0_14] : memref<2x128xf32, #tpu.memory_space<vmem>>, vector<2x128xf32>
    tpu.vector_store %arg6[%c0_13, %c0_14], %17 {strides = array<i32>} : memref<2x128xf32, #tpu.memory_space<vmem>>, vector<2x128xf32>,
    return
  }
  func.func @transform_0(%arg0: i32) -> (i32, i32) {
    %c0_i32 = arith.constant 0 : i32
    %c0_i32_0 = arith.constant 0 : i32
    return %arg0, %c0_i32 : i32, i32
  }
  func.func @transform_1(%arg0: i32) -> (i32, i32) {
    %c0_i32 = arith.constant 0 : i32
    %c0_i32_0 = arith.constant 0 : i32
    %c0_i32_1 = arith.constant 0 : i32
    return %c0_i32, %c0_i32_0 : i32, i32
  }
  func.func @transform_2(%arg0: i32) -> (i32, i32) {
    %c0_i32 = arith.constant 0 : i32
    %c0_i32_0 = arith.constant 0 : i32
    %c0_i32_1 = arith.constant 0 : i32
    return %c0_i32, %c0_i32_0 : i32, i32
  }
  func.func @transform_3(%arg0: i32) -> (i32, i32) {
    %c0_i32 = arith.constant 0 : i32
    %c0_i32_0 = arith.constant 0 : i32
    %c0_i32_1 = arith.constant 0 : i32
    return %c0_i32, %c0_i32_0 : i32, i32
  }
  func.func @transform_4(%arg0: i32) -> (i32, i32) {
    %c0_i32 = arith.constant 0 : i32
    %c0_i32_0 = arith.constant 0 : i32
    %c0_i32_1 = arith.constant 0 : i32
    return %c0_i32, %c0_i32_0 : i32, i32
  }
  func.func @transform_5(%arg0: i32) -> (i32, i32) {
    %c0_i32 = arith.constant 0 : i32
    %c0_i32_0 = arith.constant 0 : i32
    return %arg0, %c0_i32 : i32, i32
  }
}

</mosaic_0001>

<llo_original>
// kernel: nba_forward.1
$region0: #{nba_forward.1}
  #allocation0 [shape = 'u32[]', space=smem, size = 0x4, offset = 0x4, fixed_abs, tag = 'smem constant byte address 0x4 - core index']
  #allocation1 [shape = 'u32[144,128]{1,0:T(1,128)}', space=vmem, size = 0x12000, scoped, tag = 'internal scratch']
  %s0 = inlined_call_operand.vmem [shape: f32[2,512], index: 0, kind: input, shape index: {}]
  %s1 = inlined_call_operand.hbm [shape: f32[512,384], index: 1, kind: input, shape index: {}]
  %s2 = inlined_call_operand.vmem [shape: f32[1,384], index: 2, kind: input, shape index: {}]
  %s3 = inlined_call_operand.hbm [shape: f32[384,128], index: 3, kind: input, shape index: {}]
  %s4 = inlined_call_operand.vmem [shape: f32[1,128], index: 4, kind: input, shape index: {}]
  %s5 = inlined_call_operand.hbm [shape: f32[2,128], index: 5, kind: output, shape index: {}]
  %s6 = sld [smem:[#allocation0]]
  $region38: #{nba_forward.1} parent=0
    _
  %s8 = ssub.s32 1, %s6
  %s9 = scalar_select 0, %s8, %s6
  $region1: #{nba_forward.1} parent=0
    #allocation2 [shape = 'u8[786432]{0}', space=vmem, size = 0xc0000, scoped, tag = 'input window, operand 1, single buffered']
    #allocation3 [shape = 's32[1]{0}', space=sflag, size = 0x4, scoped, tag = 'scoped memory for nba_forward.1']
    #allocation4 [shape = 's32[1]{0}', space=sflag, size = 0x4, scoped, tag = 'scoped memory for nba_forward.1']
    #allocation5 [shape = 'u8[196608]{0}', space=vmem, size = 0x30000, scoped, tag = 'input window, operand 3, single buffered']
    #allocation6 [shape = 's32[1]{0}', space=sflag, size = 0x4, scoped, tag = 'scoped memory for nba_forward.1']
    #allocation7 [shape = 'u8[1024]{0}', space=vmem, size = 0x400, scoped, tag = 'output window, operand 0, single buffered']
    %10 = vsyncpa [#allocation3], 0
    %11 = vsyncpa [#allocation6], 0
    %12 = vsyncpa [#allocation4], 0
    // Predicated region
    $region2: #{nba_forward.1} parent=1 // pred_check
      _
    $region3: #{nba_forward.1} parent=1 // pred_check_branch
      %14 = sbr.rel (0) target = $region5
    $region4: #{nba_forward.1} parent=1 // pred_region
      _
    $region5: #{nba_forward.1} parent=1 // pred_fallthru
      _
    // Predicated region
    $region6: #{nba_forward.1} parent=1 // pred_check
      _
    $region7: #{nba_forward.1} parent=1 // pred_check_branch
      %16 = sbr.rel (0) target = $region9
    $region8: #{nba_forward.1} parent=1 // pred_region
      %s18 = ssub.s32 24576, 24576
      %19 = vsyncadd [#allocation3], %s18
      %s20 = sshll.u32 [#allocation2], 4
      %s21 = int_to_ptr.vmem [resolvable:$true] %s20
      %26 = dma.hbm_to_vmem [thread:$0]  %s1, 24576, %s21, [#allocation3], 384, 384, 24
    $region9: #{nba_forward.1} parent=1 // pred_fallthru
      _
    // Predicated region
    $region10: #{nba_forward.1} parent=1 // pred_check
      _
    $region11: #{nba_forward.1} parent=1 // pred_check_branch
      %28 = sbr.rel (0) target = $region13
    $region12: #{nba_forward.1} parent=1 // pred_region
      _
    $region13: #{nba_forward.1} parent=1 // pred_fallthru
      _
    // Predicated region
    $region14: #{nba_forward.1} parent=1 // pred_check
      _
    $region15: #{nba_forward.1} parent=1 // pred_check_branch
      %30 = sbr.rel (0) target = $region17
    $region16: #{nba_forward.1} parent=1 // pred_region
      %s32 = ssub.s32 6144, 6144
      %33 = vsyncadd [#allocation6], %s32
      %s34 = sshll.u32 [#allocation5], 4
      %s35 = int_to_ptr.vmem [resolvable:$true] %s34
      %40 = dma.hbm_to_vmem [thread:$0]  %s3, 6144, %s35, [#allocation6], 128, 128, 8
    $region17: #{nba_forward.1} parent=1 // pred_fallthru
      _
    // Predicated region
    $region18: #{nba_forward.1} parent=1 // pred_check
      _
    $region19: #{nba_forward.1} parent=1 // pred_check_branch
      %42 = sbr.rel (0) target = $region21
    $region20: #{nba_forward.1} parent=1 // pred_region
      _
    $region21: #{nba_forward.1} parent=1 // pred_fallthru
      _
    // Predicated region
    $region22: #{nba_forward.1} parent=1 // pred_check
      _
    $region23: #{nba_forward.1} parent=1 // pred_check_branch
      %44 = sbr.rel (0) target = $region25
    $region24: #{nba_forward.1} parent=1 // pred_region
      %45 = dma.done [#allocation3], 24576
    $region25: #{nba_forward.1} parent=1 // pred_fallthru
      _
    // Predicated region
    $region26: #{nba_forward.1} parent=1 // pred_check
      _
    $region27: #{nba_forward.1} parent=1 // pred_check_branch
      %47 = sbr.rel (0) target = $region29
    $region28: #{nba_forward.1} parent=1 // pred_region
      %48 = dma.done [#allocation6], 6144
    $region29: #{nba_forward.1} parent=1 // pred_fallthru
      _
    %v49 = vld [vmem:[%s0] sm:$0xff]
    %v50 = vld [vmem:[#allocation2] sm:$0xff]
    %v51 = vld [vmem:[#allocation2 + $0x8] sm:$0xff]
    %v52 = vld [vmem:[#allocation2 + $0x10] sm:$0xff]
    %v53 = vld [vmem:[#allocation2 + $0x18] sm:$0xff]
    %v54 = vld [vmem:[#allocation2 + $0x20] sm:$0xff]
    %v55 = vld [vmem:[#allocation2 + $0x28] sm:$0xff]
    %v56 = vld [vmem:[#allocation2 + $0x30] sm:$0xff]
    %v57 = vld [vmem:[#allocation2 + $0x38] sm:$0xff]
    %v58 = vld [vmem:[#allocation2 + $0x40] sm:$0xff]
    %v59 = vld [vmem:[#allocation2 + $0x48] sm:$0xff]
    %v60 = vld [vmem:[#allocation2 + $0x50] sm:$0xff]
    %v61 = vld [vmem:[#allocation2 + $0x58] sm:$0xff]
    %v62 = vld [vmem:[#allocation2 + $0x60] sm:$0xff]
    %v63 = vld [vmem:[#allocation2 + $0x68] sm:$0xff]
    %v64 = vld [vmem:[#allocation2 + $0x70] sm:$0xff]
    %v65 = vld [vmem:[#allocation2 + $0x78] sm:$0xff]
    %v66 = vld [vmem:[#allocation2 + $0x80] sm:$0xff]
    %v67 = vld [vmem:[#allocation2 + $0x88] sm:$0xff]
    %v68 = vld [vmem:[#allocation2 + $0x90] sm:$0xff]
    %v69 = vld [vmem:[#allocation2 + $0x98] sm:$0xff]
    %v70 = vld [vmem:[#allocation2 + $0xa0] sm:$0xff]
    %v71 = vld [vmem:[#allocation2 + $0xa8] sm:$0xff]
    %v72 = vld [vmem:[#allocation2 + $0xb0] sm:$0xff]
    %v73 = vld [vmem:[#allocation2 + $0xb8] sm:$0xff]
    %v74 = vld [vmem:[#allocation2 + $0xc0] sm:$0xff]
    %v75 = vld [vmem:[#allocation2 + $0xc8] sm:$0xff]
    %v76 = vld [vmem:[#allocation2 + $0xd0] sm:$0xff]
    %v77 = vld [vmem:[#allocation2 + $0xd8] sm:$0xff]
    %v78 = vld [vmem:[#allocation2 + $0xe0] sm:$0xff]
    %v79 = vld [vmem:[#allocation2 + $0xe8] sm:$0xff]
    %v80 = vld [vmem:[#allocation2 + $0xf0] sm:$0xff]
    %v81 = vld [vmem:[#allocation2 + $0xf8] sm:$0xff]
    %v82 = vld [vmem:[#allocation2 + $0x100] sm:$0xff]
    %v83 = vld [vmem:[#allocation2 + $0x108] sm:$0xff]
    %v84 = vld [vmem:[#allocation2 + $0x110] sm:$0xff]
    %v85 = vld [vmem:[#allocation2 + $0x118] sm:$0xff]
    %v86 = vld [vmem:[#allocation2 + $0x120] sm:$0xff]
    %v87 = vld [vmem:[#allocation2 + $0x128] sm:$0xff]
    %v88 = vld [vmem:[#allocation2 + $0x130] sm:$0xff]
    %v89 = vld [vmem:[#allocation2 + $0x138] sm:$0xff]
    %v90 = vld [vmem:[#allocation2 + $0x140] sm:$0xff]
    %v91 = vld [vmem:[#allocation2 + $0x148] sm:$0xff]
    %v92 = vld [vmem:[#allocation2 + $0x150] sm:$0xff]
    %v93 = vld [vmem:[#allocation2 + $0x158] sm:$0xff]
    %v94 = vld [vmem:[#allocation2 + $0x160] sm:$0xff]
    %v95 = vld [vmem:[#allocation2 + $0x168] sm:$0xff]
    %v96 = vld [vmem:[#allocation2 + $0x170] sm:$0xff]
    %v97 = vld [vmem:[#allocation2 + $0x178] sm:$0xff]
    %v98 = vld [vmem:[#allocation2 + $0x180] sm:$0xff]
    %v99 = vld [vmem:[#allocation2 + $0x188] sm:$0xff]
    %v100 = vld [vmem:[#allocation2 + $0x190] sm:$0xff]
    %v101 = vld [vmem:[#allocation2 + $0x198] sm:$0xff]
    %v102 = vld [vmem:[#allocation2 + $0x1a0] sm:$0xff]
    %v103 = vld [vmem:[#allocation2 + $0x1a8] sm:$0xff]
    %v104 = vld [vmem:[#allocation2 + $0x1b0] sm:$0xff]
    %v105 = vld [vmem:[#allocation2 + $0x1b8] sm:$0xff]
    %v106 = vld [vmem:[#allocation2 + $0x1c0] sm:$0xff]
    %v107 = vld [vmem:[#allocation2 + $0x1c8] sm:$0xff]
    %v108 = vld [vmem:[#allocation2 + $0x1d0] sm:$0xff]
    %v109 = vld [vmem:[#allocation2 + $0x1d8] sm:$0xff]
    %v110 = vld [vmem:[#allocation2 + $0x1e0] sm:$0xff]
    %v111 = vld [vmem:[#allocation2 + $0x1e8] sm:$0xff]
    %v112 = vld [vmem:[#allocation2 + $0x1f0] sm:$0xff]
    %v113 = vld [vmem:[#allocation2 + $0x1f8] sm:$0xff]
    %v114 = vld [vmem:[#allocation2 + $0x200] sm:$0xff]
    %v115 = vld [vmem:[#allocation2 + $0x208] sm:$0xff]
    %v116 = vld [vmem:[#allocation2 + $0x210] sm:$0xff]
    %v117 = vld [vmem:[#allocation2 + $0x218] sm:$0xff]
    %v118 = vld [vmem:[#allocation2 + $0x220] sm:$0xff]
    %v119 = vld [vmem:[#allocation2 + $0x228] sm:$0xff]
    %v120 = vld [vmem:[#allocation2 + $0x230] sm:$0xff]
    %v121 = vld [vmem:[#allocation2 + $0x238] sm:$0xff]
    %v122 = vld [vmem:[#allocation2 + $0x240] sm:$0xff]
    %v123 = vld [vmem:[#allocation2 + $0x248] sm:$0xff]
    %v124 = vld [vmem:[#allocation2 + $0x250] sm:$0xff]
    %v125 = vld [vmem:[#allocation2 + $0x258] sm:$0xff]
    %v126 = vld [vmem:[#allocation2 + $0x260] sm:$0xff]
    %v127 = vld [vmem:[#allocation2 + $0x268] sm:$0xff]
    %v128 = vld [vmem:[#allocation2 + $0x270] sm:$0xff]
    %v129 = vld [vmem:[#allocation2 + $0x278] sm:$0xff]
    %v130 = vld [vmem:[#allocation2 + $0x280] sm:$0xff]
    %v131 = vld [vmem:[#allocation2 + $0x288] sm:$0xff]
    %v132 = vld [vmem:[#allocation2 + $0x290] sm:$0xff]
    %v133 = vld [vmem:[#allocation2 + $0x298] sm:$0xff]
    %v134 = vld [vmem:[#allocation2 + $0x2a0] sm:$0xff]
    %v135 = vld [vmem:[#allocation2 + $0x2a8] sm:$0xff]
    %v136 = vld [vmem:[#allocation2 + $0x2b0] sm:$0xff]
    %v137 = vld [vmem:[#allocation2 + $0x2b8] sm:$0xff]
    %v138 = vld [vmem:[#allocation2 + $0x2c0] sm:$0xff]
    %v139 = vld [vmem:[#allocation2 + $0x2c8] sm:$0xff]
    %v140 = vld [vmem:[#allocation2 + $0x2d0] sm:$0xff]
    %v141 = vld [vmem:[#allocation2 + $0x2d8] sm:$0xff]
    %v142 = vld [vmem:[#allocation2 + $0x2e0] sm:$0xff]
    %v143 = vld [vmem:[#allocation2 + $0x2e8] sm:$0xff]
    %v144 = vld [vmem:[#allocation2 + $0x2f0] sm:$0xff]
    %v145 = vld [vmem:[#allocation2 + $0x2f8] sm:$0xff]
    %v146 = vld [vmem:[#allocation2 + $0x300] sm:$0xff]
    %v147 = vld [vmem:[#allocation2 + $0x308] sm:$0xff]
    %v148 = vld [vmem:[#allocation2 + $0x310] sm:$0xff]
    %v149 = vld [vmem:[#allocation2 + $0x318] sm:$0xff]
    %v150 = vld [vmem:[#allocation2 + $0x320] sm:$0xff]
    %v151 = vld [vmem:[#allocation2 + $0x328] sm:$0xff]
    %v152 = vld [vmem:[#allocation2 + $0x330] sm:$0xff]
    %v153 = vld [vmem:[#allocation2 + $0x338] sm:$0xff]
    %v154 = vld [vmem:[#allocation2 + $0x340] sm:$0xff]
    %v155 = vld [vmem:[#allocation2 + $0x348] sm:$0xff]
    %v156 = vld [vmem:[#allocation2 + $0x350] sm:$0xff]
    %v157 = vld [vmem:[#allocation2 + $0x358] sm:$0xff]
    %v158 = vld [vmem:[#allocation2 + $0x360] sm:$0xff]
    %v159 = vld [vmem:[#allocation2 + $0x368] sm:$0xff]
    %v160 = vld [vmem:[#allocation2 + $0x370] sm:$0xff]
    %v161 = vld [vmem:[#allocation2 + $0x378] sm:$0xff]
    %v162 = vld [vmem:[#allocation2 + $0x380] sm:$0xff]
    %v163 = vld [vmem:[#allocation2 + $0x388] sm:$0xff]
    %v164 = vld [vmem:[#allocation2 + $0x390] sm:$0xff]
    %v165 = vld [vmem:[#allocation2 + $0x398] sm:$0xff]
    %v166 = vld [vmem:[#allocation2 + $0x3a0] sm:$0xff]
    %v167 = vld [vmem:[#allocation2 + $0x3a8] sm:$0xff]
    %v168 = vld [vmem:[#allocation2 + $0x3b0] sm:$0xff]
    %v169 = vld [vmem:[#allocation2 + $0x3b8] sm:$0xff]
    %v170 = vld [vmem:[#allocation2 + $0x3c0] sm:$0xff]
    %v171 = vld [vmem:[#allocation2 + $0x3c8] sm:$0xff]
    %v172 = vld [vmem:[#allocation2 + $0x3d0] sm:$0xff]
    %v173 = vld [vmem:[#allocation2 + $0x3d8] sm:$0xff]
    %v174 = vld [vmem:[#allocation2 + $0x3e0] sm:$0xff]
    %v175 = vld [vmem:[#allocation2 + $0x3e8] sm:$0xff]
    %v176 = vld [vmem:[#allocation2 + $0x3f0] sm:$0xff]
    %v177 = vld [vmem:[#allocation2 + $0x3f8] sm:$0xff]
    %v178 = vld [vmem:[#allocation2 + $0x400] sm:$0xff]
    %v179 = vld [vmem:[#allocation2 + $0x408] sm:$0xff]
    %v180 = vld [vmem:[#allocation2 + $0x410] sm:$0xff]
    %v181 = vld [vmem:[#allocation2 + $0x418] sm:$0xff]
    %v182 = vld [vmem:[#allocation2 + $0x420] sm:$0xff]
    %v183 = vld [vmem:[#allocation2 + $0x428] sm:$0xff]
    %v184 = vld [vmem:[#allocation2 + $0x430] sm:$0xff]
    %v185 = vld [vmem:[#allocation2 + $0x438] sm:$0xff]
    %v186 = vld [vmem:[#allocation2 + $0x440] sm:$0xff]
    %v187 = vld [vmem:[#allocation2 + $0x448] sm:$0xff]
    %v188 = vld [vmem:[#allocation2 + $0x450] sm:$0xff]
    %v189 = vld [vmem:[#allocation2 + $0x458] sm:$0xff]
    %v190 = vld [vmem:[#allocation2 + $0x460] sm:$0xff]
    %v191 = vld [vmem:[#allocation2 + $0x468] sm:$0xff]
    %v192 = vld [vmem:[#allocation2 + $0x470] sm:$0xff]
    %v193 = vld [vmem:[#allocation2 + $0x478] sm:$0xff]
    %v194 = vld [vmem:[#allocation2 + $0x480] sm:$0xff]
    %v195 = vld [vmem:[#allocation2 + $0x488] sm:$0xff]
    %v196 = vld [vmem:[#allocation2 + $0x490] sm:$0xff]
    %v197 = vld [vmem:[#allocation2 + $0x498] sm:$0xff]
    %v198 = vld [vmem:[#allocation2 + $0x4a0] sm:$0xff]
    %v199 = vld [vmem:[#allocation2 + $0x4a8] sm:$0xff]
    %v200 = vld [vmem:[#allocation2 + $0x4b0] sm:$0xff]
    %v201 = vld [vmem:[#allocation2 + $0x4b8] sm:$0xff]
    %v202 = vld [vmem:[#allocation2 + $0x4c0] sm:$0xff]
    %v203 = vld [vmem:[#allocation2 + $0x4c8] sm:$0xff]
    %v204 = vld [vmem:[#allocation2 + $0x4d0] sm:$0xff]
    %v205 = vld [vmem:[#allocation2 + $0x4d8] sm:$0xff]
    %v206 = vld [vmem:[#allocation2 + $0x4e0] sm:$0xff]
    %v207 = vld [vmem:[#allocation2 + $0x4e8] sm:$0xff]
    %v208 = vld [vmem:[#allocation2 + $0x4f0] sm:$0xff]
    %v209 = vld [vmem:[#allocation2 + $0x4f8] sm:$0xff]
    %v210 = vld [vmem:[#allocation2 + $0x500] sm:$0xff]
    %v211 = vld [vmem:[#allocation2 + $0x508] sm:$0xff]
    %v212 = vld [vmem:[#allocation2 + $0x510] sm:$0xff]
    %v213 = vld [vmem:[#allocation2 + $0x518] sm:$0xff]
    %v214 = vld [vmem:[#allocation2 + $0x520] sm:$0xff]
    %v215 = vld [vmem:[#allocation2 + $0x528] sm:$0xff]
    %v216 = vld [vmem:[#allocation2 + $0x530] sm:$0xff]
    %v217 = vld [vmem:[#allocation2 + $0x538] sm:$0xff]
    %v218 = vld [vmem:[#allocation2 + $0x540] sm:$0xff]
    %v219 = vld [vmem:[#allocation2 + $0x548] sm:$0xff]
    %v220 = vld [vmem:[#allocation2 + $0x550] sm:$0xff]
    %v221 = vld [vmem:[#allocation2 + $0x558] sm:$0xff]
    %v222 = vld [vmem:[#allocation2 + $0x560] sm:$0xff]
    %v223 = vld [vmem:[#allocation2 + $0x568] sm:$0xff]
    %v224 = vld [vmem:[#allocation2 + $0x570] sm:$0xff]
    %v225 = vld [vmem:[#allocation2 + $0x578] sm:$0xff]
    %v226 = vld [vmem:[#allocation2 + $0x580] sm:$0xff]
    %v227 = vld [vmem:[#allocation2 + $0x588] sm:$0xff]
    %v228 = vld [vmem:[#allocation2 + $0x590] sm:$0xff]
    %v229 = vld [vmem:[#allocation2 + $0x598] sm:$0xff]
    %v230 = vld [vmem:[#allocation2 + $0x5a0] sm:$0xff]
    %v231 = vld [vmem:[#allocation2 + $0x5a8] sm:$0xff]
    %v232 = vld [vmem:[#allocation2 + $0x5b0] sm:$0xff]
    %v233 = vld [vmem:[#allocation2 + $0x5b8] sm:$0xff]
    %v234 = vld [vmem:[#allocation2 + $0x5c0] sm:$0xff]
    %v235 = vld [vmem:[#allocation2 + $0x5c8] sm:$0xff]
    %v236 = vld [vmem:[#allocation2 + $0x5d0] sm:$0xff]
    %v237 = vld [vmem:[#allocation2 + $0x5d8] sm:$0xff]
    %v238 = vld [vmem:[#allocation2 + $0x5e0] sm:$0xff]
    %v239 = vld [vmem:[#allocation2 + $0x5e8] sm:$0xff]
    %v240 = vld [vmem:[#allocation2 + $0x5f0] sm:$0xff]
    %v241 = vld [vmem:[#allocation2 + $0x5f8] sm:$0xff]
    %v242 = vld [vmem:[%s2] sm:$0x7]
    %v244 = vlaneseq
    %v245 = vshrl.u32 %v244, 7
    %v246 = vsub.s32 0, %v245
    %v247 = vrot.slane %v242, %v246
    %v248 = vlaneseq
    %v249 = vshrl.u32 %v248, 7
    %v250 = vsub.s32 1, %v249
    %v251 = vrot.slane %v242, %v250
    %v252 = vlaneseq
    %v253 = vshrl.u32 %v252, 7
    %v254 = vsub.s32 2, %v253
    %v255 = vrot.slane %v242, %v254
    %v260 = vcombine.high %v49, %v49
    %v262 = vunpack.c.l.s4 1983009808
    %v263 = vunpack.c.0.s8 %v262
    %v264 = vlaneseq
    %v265 = vshrl.u32 %v264, 7
    %v266 = vsub.s32 %v263, %v265
    %v267 = vrot.slane %v49, %v266
    %v269 = vunpack.c.l.s4 1983009808
    %v270 = vunpack.c.0.s8 %v269
    %v271 = vlaneseq
    %v272 = vshrl.u32 %v271, 7
    %v273 = vsub.s32 %v270, %v272
    %v274 = vrot.slane %v260, %v273
    %v275 = vcombine.high %v267, %v267
    %v276 = vcombine.high %v274, %v274
    %281 = vmatprep.subr.mxu0 %v51
    %282 = vmatpush1.msra.mxu0 %v50
    %283 = vmatprep.subr.mxu0 %v54
    %284 = vmatpush1.msra.mxu0 %v53
    %285 = vmatprep.subr.mxu0 %v57
    %286 = vmatpush1.msra.mxu0 %v56
    %287 = vmatprep.subr.mxu0 %v60
    %288 = vmatpush1.msra.mxu0 %v59
    %289 = vmatprep.subr.mxu0 %v63
    %290 = vmatpush1.msra.mxu0 %v62
    %291 = vmatprep.subr.mxu0 %v66
    %292 = vmatpush1.msra.mxu0 %v65
    %293 = vmatprep.subr.mxu0 %v69
    %294 = vmatpush1.msra.mxu0 %v68
    %295 = vmatprep.subr.mxu0 %v72
    %296 = vmatpush1.msra.mxu0 %v71
    %297 = vmatprep.subr.mxu0 %v75
    %298 = vmatpush1.msra.mxu0 %v74
    %299 = vmatprep.subr.mxu0 %v78
    %300 = vmatpush1.msra.mxu0 %v77
    %301 = vmatprep.subr.mxu0 %v81
    %302 = vmatpush1.msra.mxu0 %v80
    %303 = vmatprep.subr.mxu0 %v84
    %304 = vmatpush1.msra.mxu0 %v83
    %305 = vmatprep.subr.mxu0 %v87
    %306 = vmatpush1.msra.mxu0 %v86
    %307 = vmatprep.subr.mxu0 %v90
    %308 = vmatpush1.msra.mxu0 %v89
    %309 = vmatprep.subr.mxu0 %v93
    %310 = vmatpush1.msra.mxu0 %v92
    %311 = vmatprep.subr.mxu0 %v96
    %312 = vmatpush1.msra.mxu0 %v95
    %313 = vmatprep.subr.mxu0 %v99
    %314 = vmatpush1.msra.mxu0 %v98
    %315 = vmatprep.subr.mxu0 %v102
    %316 = vmatpush1.msra.mxu0 %v101
    %317 = vmatprep.subr.mxu0 %v105
    %318 = vmatpush1.msra.mxu0 %v104
    %319 = vmatprep.subr.mxu0 %v108
    %320 = vmatpush1.msra.mxu0 %v107
    %321 = vmatprep.subr.mxu0 %v111
    %322 = vmatpush1.msra.mxu0 %v110
    %323 = vmatprep.subr.mxu0 %v114
    %324 = vmatpush1.msra.mxu0 %v113
    %325 = vmatprep.subr.mxu0 %v117
    %326 = vmatpush1.msra.mxu0 %v116
    %327 = vmatprep.subr.mxu0 %v120
    %328 = vmatpush1.msra.mxu0 %v119
    %329 = vmatprep.subr.mxu0 %v123
    %330 = vmatpush1.msra.mxu0 %v122
    %331 = vmatprep.subr.mxu0 %v126
    %332 = vmatpush1.msra.mxu0 %v125
    %333 = vmatprep.subr.mxu0 %v129
    %334 = vmatpush1.msra.mxu0 %v128
    %335 = vmatprep.subr.mxu0 %v132
    %336 = vmatpush1.msra.mxu0 %v131
    %337 = vmatprep.subr.mxu0 %v135
    %338 = vmatpush1.msra.mxu0 %v134
    %339 = vmatprep.subr.mxu0 %v138
    %340 = vmatpush1.msra.mxu0 %v137
    %341 = vmatprep.subr.mxu0 %v141
    %342 = vmatpush1.msra.mxu0 %v140
    %343 = vmatprep.subr.mxu0 %v144
    %344 = vmatpush1.msra.mxu0 %v143
    %345 = vmatprep.mubr.f32.mxu0 %v275
    %346 = vmatmul.mubr.f32.gmra.mrb[0].mxu0 %v267
    %v347 = vpop.f32.mrb[0].mxu0
    %v348 = vadd.f32 %v247, %v347
    %v349 = vpop.f32.mrb[0].mxu0
    %v350 = vadd.f32 %v251, %v349
    %351 = vdwg.mxu0
    %352 = vmatprep.subr.mxu0 %v147
    %353 = vmatpush1.msra.mxu0 %v146
    %354 = vmatprep.subr.mxu0 %v150
    %355 = vmatpush1.msra.mxu0 %v149
    %356 = vmatprep.subr.mxu0 %v153
    %357 = vmatpush1.msra.mxu0 %v152
    %358 = vmatprep.subr.mxu0 %v156
    %359 = vmatpush1.msra.mxu0 %v155
    %360 = vmatprep.subr.mxu0 %v159
    %361 = vmatpush1.msra.mxu0 %v158
    %362 = vmatprep.subr.mxu0 %v162
    %363 = vmatpush1.msra.mxu0 %v161
    %364 = vmatprep.subr.mxu0 %v165
    %365 = vmatpush1.msra.mxu0 %v164
    %366 = vmatprep.subr.mxu0 %v168
    %367 = vmatpush1.msra.mxu0 %v167
    %368 = vmatprep.subr.mxu0 %v171
    %369 = vmatpush1.msra.mxu0 %v170
    %370 = vmatprep.subr.mxu0 %v174
    %371 = vmatpush1.msra.mxu0 %v173
    %372 = vmatprep.subr.mxu0 %v177
    %373 = vmatpush1.msra.mxu0 %v176
    %374 = vmatprep.subr.mxu0 %v180
    %375 = vmatpush1.msra.mxu0 %v179
    %376 = vmatprep.subr.mxu0 %v183
    %377 = vmatpush1.msra.mxu0 %v182
    %378 = vmatprep.subr.mxu0 %v186
    %379 = vmatpush1.msra.mxu0 %v185
    %380 = vmatprep.subr.mxu0 %v189
    %381 = vmatpush1.msra.mxu0 %v188
    %382 = vmatprep.subr.mxu0 %v192
    %383 = vmatpush1.msra.mxu0 %v191
    %384 = vmatprep.subr.mxu0 %v195
    %385 = vmatpush1.msra.mxu0 %v194
    %386 = vmatprep.subr.mxu0 %v198
    %387 = vmatpush1.msra.mxu0 %v197
    %388 = vmatprep.subr.mxu0 %v201
    %389 = vmatpush1.msra.mxu0 %v200
    %390 = vmatprep.subr.mxu0 %v204
    %391 = vmatpush1.msra.mxu0 %v203
    %392 = vmatprep.subr.mxu0 %v207
    %393 = vmatpush1.msra.mxu0 %v206
    %394 = vmatprep.subr.mxu0 %v210
    %395 = vmatpush1.msra.mxu0 %v209
    %396 = vmatprep.subr.mxu0 %v213
    %397 = vmatpush1.msra.mxu0 %v212
    %398 = vmatprep.subr.mxu0 %v216
    %399 = vmatpush1.msra.mxu0 %v215
    %400 = vmatprep.subr.mxu0 %v219
    %401 = vmatpush1.msra.mxu0 %v218
    %402 = vmatprep.subr.mxu0 %v222
    %403 = vmatpush1.msra.mxu0 %v221
    %404 = vmatprep.subr.mxu0 %v225
    %405 = vmatpush1.msra.mxu0 %v224
    %406 = vmatprep.subr.mxu0 %v228
    %407 = vmatpush1.msra.mxu0 %v227
    %408 = vmatprep.subr.mxu0 %v231
    %409 = vmatpush1.msra.mxu0 %v230
    %410 = vmatprep.subr.mxu0 %v234
    %411 = vmatpush1.msra.mxu0 %v233
    %412 = vmatprep.subr.mxu0 %v237
    %413 = vmatpush1.msra.mxu0 %v236
    %414 = vmatprep.subr.mxu0 %v240
    %415 = vmatpush1.msra.mxu0 %v239
    %416 = vmatprep.mubr.f32.mxu0 %v276
    %417 = vmatmul.mubr.f32.gmra.mrb[0].mxu0 %v274
    %v418 = vpop.f32.mrb[0].mxu0
    %v419 = vadd.f32 %v348, %v418
    %v420 = vpop.f32.mrb[0].mxu0
    %v421 = vadd.f32 %v350, %v420
    %422 = vdwg.mxu0
    %423 = vmatprep.subr.mxu0 0.0
    %424 = vmatpush1.msra.mxu0 %v52
    %425 = vmatprep.subr.mxu0 0.0
    %426 = vmatpush1.msra.mxu0 %v55
    %427 = vmatprep.subr.mxu0 0.0
    %428 = vmatpush1.msra.mxu0 %v58
    %429 = vmatprep.subr.mxu0 0.0
    %430 = vmatpush1.msra.mxu0 %v61
    %431 = vmatprep.subr.mxu0 0.0
    %432 = vmatpush1.msra.mxu0 %v64
    %433 = vmatprep.subr.mxu0 0.0
    %434 = vmatpush1.msra.mxu0 %v67
    %435 = vmatprep.subr.mxu0 0.0
    %436 = vmatpush1.msra.mxu0 %v70
    %437 = vmatprep.subr.mxu0 0.0
    %438 = vmatpush1.msra.mxu0 %v73
    %439 = vmatprep.subr.mxu0 0.0
    %440 = vmatpush1.msra.mxu0 %v76
    %441 = vmatprep.subr.mxu0 0.0
    %442 = vmatpush1.msra.mxu0 %v79
    %443 = vmatprep.subr.mxu0 0.0
    %444 = vmatpush1.msra.mxu0 %v82
    %445 = vmatprep.subr.mxu0 0.0
    %446 = vmatpush1.msra.mxu0 %v85
    %447 = vmatprep.subr.mxu0 0.0
    %448 = vmatpush1.msra.mxu0 %v88
    %449 = vmatprep.subr.mxu0 0.0
    %450 = vmatpush1.msra.mxu0 %v91
    %451 = vmatprep.subr.mxu0 0.0
    %452 = vmatpush1.msra.mxu0 %v94
    %453 = vmatprep.subr.mxu0 0.0
    %454 = vmatpush1.msra.mxu0 %v97
    %455 = vmatprep.subr.mxu0 0.0
    %456 = vmatpush1.msra.mxu0 %v100
    %457 = vmatprep.subr.mxu0 0.0
    %458 = vmatpush1.msra.mxu0 %v103
    %459 = vmatprep.subr.mxu0 0.0
    %460 = vmatpush1.msra.mxu0 %v106
    %461 = vmatprep.subr.mxu0 0.0
    %462 = vmatpush1.msra.mxu0 %v109
    %463 = vmatprep.subr.mxu0 0.0
    %464 = vmatpush1.msra.mxu0 %v112
    %465 = vmatprep.subr.mxu0 0.0
    %466 = vmatpush1.msra.mxu0 %v115
    %467 = vmatprep.subr.mxu0 0.0
    %468 = vmatpush1.msra.mxu0 %v118
    %469 = vmatprep.subr.mxu0 0.0
    %470 = vmatpush1.msra.mxu0 %v121
    %471 = vmatprep.subr.mxu0 0.0
    %472 = vmatpush1.msra.mxu0 %v124
    %473 = vmatprep.subr.mxu0 0.0
    %474 = vmatpush1.msra.mxu0 %v127
    %475 = vmatprep.subr.mxu0 0.0
    %476 = vmatpush1.msra.mxu0 %v130
    %477 = vmatprep.subr.mxu0 0.0
    %478 = vmatpush1.msra.mxu0 %v133
    %479 = vmatprep.subr.mxu0 0.0
    %480 = vmatpush1.msra.mxu0 %v136
    %481 = vmatprep.subr.mxu0 0.0
    %482 = vmatpush1.msra.mxu0 %v139
    %483 = vmatprep.subr.mxu0 0.0
    %484 = vmatpush1.msra.mxu0 %v142
    %485 = vmatprep.subr.mxu0 0.0
    %486 = vmatpush1.msra.mxu0 %v145
    %487 = vmatprep.mubr.f32.mxu0 %v275
    %488 = vmatmul.mubr.f32.gmra.mrb[0].mxu0 %v267
    %v489 = vpop.f32.mrb[0].mxu0
    %v490 = vadd.f32 %v255, %v489
    %v491 = vpop.f32.mrb[0].mxu0
    %492 = vdwg.mxu0
    %493 = vmatprep.subr.mxu0 0.0
    %494 = vmatpush1.msra.mxu0 %v148
    %495 = vmatprep.subr.mxu0 0.0
    %496 = vmatpush1.msra.mxu0 %v151
    %497 = vmatprep.subr.mxu0 0.0
    %498 = vmatpush1.msra.mxu0 %v154
    %499 = vmatprep.subr.mxu0 0.0
    %500 = vmatpush1.msra.mxu0 %v157
    %501 = vmatprep.subr.mxu0 0.0
    %502 = vmatpush1.msra.mxu0 %v160
    %503 = vmatprep.subr.mxu0 0.0
    %504 = vmatpush1.msra.mxu0 %v163
    %505 = vmatprep.subr.mxu0 0.0
    %506 = vmatpush1.msra.mxu0 %v166
    %507 = vmatprep.subr.mxu0 0.0
    %508 = vmatpush1.msra.mxu0 %v169
    %509 = vmatprep.subr.mxu0 0.0
    %510 = vmatpush1.msra.mxu0 %v172
    %511 = vmatprep.subr.mxu0 0.0
    %512 = vmatpush1.msra.mxu0 %v175
    %513 = vmatprep.subr.mxu0 0.0
    %514 = vmatpush1.msra.mxu0 %v178
    %515 = vmatprep.subr.mxu0 0.0
    %516 = vmatpush1.msra.mxu0 %v181
    %517 = vmatprep.subr.mxu0 0.0
    %518 = vmatpush1.msra.mxu0 %v184
    %519 = vmatprep.subr.mxu0 0.0
    %520 = vmatpush1.msra.mxu0 %v187
    %521 = vmatprep.subr.mxu0 0.0
    %522 = vmatpush1.msra.mxu0 %v190
    %523 = vmatprep.subr.mxu0 0.0
    %524 = vmatpush1.msra.mxu0 %v193
    %525 = vmatprep.subr.mxu0 0.0
    %526 = vmatpush1.msra.mxu0 %v196
    %527 = vmatprep.subr.mxu0 0.0
    %528 = vmatpush1.msra.mxu0 %v199
    %529 = vmatprep.subr.mxu0 0.0
    %530 = vmatpush1.msra.mxu0 %v202
    %531 = vmatprep.subr.mxu0 0.0
    %532 = vmatpush1.msra.mxu0 %v205
    %533 = vmatprep.subr.mxu0 0.0
    %534 = vmatpush1.msra.mxu0 %v208
    %535 = vmatprep.subr.mxu0 0.0
    %536 = vmatpush1.msra.mxu0 %v211
    %537 = vmatprep.subr.mxu0 0.0
    %538 = vmatpush1.msra.mxu0 %v214
    %539 = vmatprep.subr.mxu0 0.0
    %540 = vmatpush1.msra.mxu0 %v217
    %541 = vmatprep.subr.mxu0 0.0
    %542 = vmatpush1.msra.mxu0 %v220
    %543 = vmatprep.subr.mxu0 0.0
    %544 = vmatpush1.msra.mxu0 %v223
    %545 = vmatprep.subr.mxu0 0.0
    %546 = vmatpush1.msra.mxu0 %v226
    %547 = vmatprep.subr.mxu0 0.0
    %548 = vmatpush1.msra.mxu0 %v229
    %549 = vmatprep.subr.mxu0 0.0
    %550 = vmatpush1.msra.mxu0 %v232
    %551 = vmatprep.subr.mxu0 0.0
    %552 = vmatpush1.msra.mxu0 %v235
    %553 = vmatprep.subr.mxu0 0.0
    %554 = vmatpush1.msra.mxu0 %v238
    %555 = vmatprep.subr.mxu0 0.0
    %556 = vmatpush1.msra.mxu0 %v241
    %557 = vmatprep.mubr.f32.mxu0 %v276
    %558 = vmatmul.mubr.f32.gmra.mrb[0].mxu0 %v274
    %v559 = vpop.f32.mrb[0].mxu0
    %v560 = vadd.f32 %v490, %v559
    %v561 = vpop.f32.mrb[0].mxu0
    %562 = vdwg.mxu0
    %vm563 = vcmp.gt.f32.partialorder %v419, 0.0
    %vm564 = vcmp.gt.f32.partialorder %v421, 0.0
    %vm565 = vcmp.gt.f32.partialorder %v560, 0.0
    %v566 = vmul.f32 %v419, 0.01
    %v567 = vmul.f32 %v421, 0.01
    %v568 = vmul.f32 %v560, 0.01
    %v569 = vsel %vm563, %v419, %v566
    %v570 = vsel %vm564, %v421, %v567
    %v571 = vsel %vm565, %v560, %v568
    %v572 = vld [vmem:[#allocation5] sm:$0xff]
    %v573 = vld [vmem:[#allocation5 + $0x8] sm:$0xff]
    %v574 = vld [vmem:[#allocation5 + $0x10] sm:$0xff]
    %v575 = vld [vmem:[#allocation5 + $0x18] sm:$0xff]
    %v576 = vld [vmem:[#allocation5 + $0x20] sm:$0xff]
    %v577 = vld [vmem:[#allocation5 + $0x28] sm:$0xff]
    %v578 = vld [vmem:[#allocation5 + $0x30] sm:$0xff]
    %v579 = vld [vmem:[#allocation5 + $0x38] sm:$0xff]
    %v580 = vld [vmem:[#allocation5 + $0x40] sm:$0xff]
    %v581 = vld [vmem:[#allocation5 + $0x48] sm:$0xff]
    %v582 = vld [vmem:[#allocation5 + $0x50] sm:$0xff]
    %v583 = vld [vmem:[#allocation5 + $0x58] sm:$0xff]
    %v584 = vld [vmem:[#allocation5 + $0x60] sm:$0xff]
    %v585 = vld [vmem:[#allocation5 + $0x68] sm:$0xff]
    %v586 = vld [vmem:[#allocation5 + $0x70] sm:$0xff]
    %v587 = vld [vmem:[#allocation5 + $0x78] sm:$0xff]
    %v588 = vld [vmem:[#allocation5 + $0x80] sm:$0xff]
    %v589 = vld [vmem:[#allocation5 + $0x88] sm:$0xff]
    %v590 = vld [vmem:[#allocation5 + $0x90] sm:$0xff]
    %v591 = vld [vmem:[#allocation5 + $0x98] sm:$0xff]
    %v592 = vld [vmem:[#allocation5 + $0xa0] sm:$0xff]
    %v593 = vld [vmem:[#allocation5 + $0xa8] sm:$0xff]
    %v594 = vld [vmem:[#allocation5 + $0xb0] sm:$0xff]
    %v595 = vld [vmem:[#allocation5 + $0xb8] sm:$0xff]
    %v596 = vld [vmem:[#allocation5 + $0xc0] sm:$0xff]
    %v597 = vld [vmem:[#allocation5 + $0xc8] sm:$0xff]
    %v598 = vld [vmem:[#allocation5 + $0xd0] sm:$0xff]
    %v599 = vld [vmem:[#allocation5 + $0xd8] sm:$0xff]
    %v600 = vld [vmem:[#allocation5 + $0xe0] sm:$0xff]
    %v601 = vld [vmem:[#allocation5 + $0xe8] sm:$0xff]
    %v602 = vld [vmem:[#allocation5 + $0xf0] sm:$0xff]
    %v603 = vld [vmem:[#allocation5 + $0xf8] sm:$0xff]
    %v604 = vld [vmem:[#allocation5 + $0x100] sm:$0xff]
    %v605 = vld [vmem:[#allocation5 + $0x108] sm:$0xff]
    %v606 = vld [vmem:[#allocation5 + $0x110] sm:$0xff]
    %v607 = vld [vmem:[#allocation5 + $0x118] sm:$0xff]
    %v608 = vld [vmem:[#allocation5 + $0x120] sm:$0xff]
    %v609 = vld [vmem:[#allocation5 + $0x128] sm:$0xff]
    %v610 = vld [vmem:[#allocation5 + $0x130] sm:$0xff]
    %v611 = vld [vmem:[#allocation5 + $0x138] sm:$0xff]
    %v612 = vld [vmem:[#allocation5 + $0x140] sm:$0xff]
    %v613 = vld [vmem:[#allocation5 + $0x148] sm:$0xff]
    %v614 = vld [vmem:[#allocation5 + $0x150] sm:$0xff]
    %v615 = vld [vmem:[#allocation5 + $0x158] sm:$0xff]
    %v616 = vld [vmem:[#allocation5 + $0x160] sm:$0xff]
    %v617 = vld [vmem:[#allocation5 + $0x168] sm:$0xff]
    %v618 = vld [vmem:[#allocation5 + $0x170] sm:$0xff]
    %v619 = vld [vmem:[#allocation5 + $0x178] sm:$0xff]
    %v620 = vld [vmem:[%s4] sm:$0x1]
    %v622 = vlaneseq
    %v623 = vshrl.u32 %v622, 7
    %v624 = vsub.s32 0, %v623
    %v625 = vrot.slane %v620, %v624
    %627 = vmatprep.subr.mxu0 0.0
    %628 = vmatpush1.msra.mxu0 %v572
    %629 = vmatprep.subr.mxu0 0.0
    %630 = vmatpush1.msra.mxu0 %v573
    %631 = vmatprep.subr.mxu0 0.0
    %632 = vmatpush1.msra.mxu0 %v574
    %633 = vmatprep.subr.mxu0 0.0
    %634 = vmatpush1.msra.mxu0 %v575
    %635 = vmatprep.subr.mxu0 0.0
    %636 = vmatpush1.msra.mxu0 %v576
    %637 = vmatprep.subr.mxu0 0.0
    %638 = vmatpush1.msra.mxu0 %v577
    %639 = vmatprep.subr.mxu0 0.0
    %640 = vmatpush1.msra.mxu0 %v578
    %641 = vmatprep.subr.mxu0 0.0
    %642 = vmatpush1.msra.mxu0 %v579
    %643 = vmatprep.subr.mxu0 0.0
    %644 = vmatpush1.msra.mxu0 %v580
    %645 = vmatprep.subr.mxu0 0.0
    %646 = vmatpush1.msra.mxu0 %v581
    %647 = vmatprep.subr.mxu0 0.0
    %648 = vmatpush1.msra.mxu0 %v582
    %649 = vmatprep.subr.mxu0 0.0
    %650 = vmatpush1.msra.mxu0 %v583
    %651 = vmatprep.subr.mxu0 0.0
    %652 = vmatpush1.msra.mxu0 %v584
    %653 = vmatprep.subr.mxu0 0.0
    %654 = vmatpush1.msra.mxu0 %v585
    %655 = vmatprep.subr.mxu0 0.0
    %656 = vmatpush1.msra.mxu0 %v586
    %657 = vmatprep.subr.mxu0 0.0
    %658 = vmatpush1.msra.mxu0 %v587
    %659 = vmatprep.subr.mxu0 0.0
    %660 = vmatpush1.msra.mxu0 %v588
    %661 = vmatprep.subr.mxu0 0.0
    %662 = vmatpush1.msra.mxu0 %v589
    %663 = vmatprep.subr.mxu0 0.0
    %664 = vmatpush1.msra.mxu0 %v590
    %665 = vmatprep.subr.mxu0 0.0
    %666 = vmatpush1.msra.mxu0 %v591
    %667 = vmatprep.subr.mxu0 0.0
    %668 = vmatpush1.msra.mxu0 %v592
    %669 = vmatprep.subr.mxu0 0.0
    %670 = vmatpush1.msra.mxu0 %v593
    %671 = vmatprep.subr.mxu0 0.0
    %672 = vmatpush1.msra.mxu0 %v594
    %673 = vmatprep.subr.mxu0 0.0
    %674 = vmatpush1.msra.mxu0 %v595
    %675 = vmatprep.subr.mxu0 0.0
    %676 = vmatpush1.msra.mxu0 %v596
    %677 = vmatprep.subr.mxu0 0.0
    %678 = vmatpush1.msra.mxu0 %v597
    %679 = vmatprep.subr.mxu0 0.0
    %680 = vmatpush1.msra.mxu0 %v598
    %681 = vmatprep.subr.mxu0 0.0
    %682 = vmatpush1.msra.mxu0 %v599
    %683 = vmatprep.subr.mxu0 0.0
    %684 = vmatpush1.msra.mxu0 %v600
    %685 = vmatprep.subr.mxu0 0.0
    %686 = vmatpush1.msra.mxu0 %v601
    %687 = vmatprep.subr.mxu0 0.0
    %688 = vmatpush1.msra.mxu0 %v602
    %689 = vmatprep.subr.mxu0 0.0
    %690 = vmatpush1.msra.mxu0 %v603
    %691 = vmatprep.mubr.f32.mxu0 %v570
    %692 = vmatmul.mubr.f32.gmra.mrb[0].mxu0 %v569
    %v693 = vpop.f32.mrb[0].mxu0
    %v694 = vadd.f32 %v625, %v693
    %v695 = vpop.f32.mrb[0].mxu0
    %696 = vdwg.mxu0
    %697 = vmatprep.subr.mxu0 0.0
    %698 = vmatpush1.msra.mxu0 %v604
    %699 = vmatprep.subr.mxu0 0.0
    %700 = vmatpush1.msra.mxu0 %v605
    %701 = vmatprep.subr.mxu0 0.0
    %702 = vmatpush1.msra.mxu0 %v606
    %703 = vmatprep.subr.mxu0 0.0
    %704 = vmatpush1.msra.mxu0 %v607
    %705 = vmatprep.subr.mxu0 0.0
    %706 = vmatpush1.msra.mxu0 %v608
    %707 = vmatprep.subr.mxu0 0.0
    %708 = vmatpush1.msra.mxu0 %v609
    %709 = vmatprep.subr.mxu0 0.0
    %710 = vmatpush1.msra.mxu0 %v610
    %711 = vmatprep.subr.mxu0 0.0
    %712 = vmatpush1.msra.mxu0 %v611
    %713 = vmatprep.subr.mxu0 0.0
    %714 = vmatpush1.msra.mxu0 %v612
    %715 = vmatprep.subr.mxu0 0.0
    %716 = vmatpush1.msra.mxu0 %v613
    %717 = vmatprep.subr.mxu0 0.0
    %718 = vmatpush1.msra.mxu0 %v614
    %719 = vmatprep.subr.mxu0 0.0
    %720 = vmatpush1.msra.mxu0 %v615
    %721 = vmatprep.subr.mxu0 0.0
    %722 = vmatpush1.msra.mxu0 %v616
    %723 = vmatprep.subr.mxu0 0.0
    %724 = vmatpush1.msra.mxu0 %v617
    %725 = vmatprep.subr.mxu0 0.0
    %726 = vmatpush1.msra.mxu0 %v618
    %727 = vmatprep.subr.mxu0 0.0
    %728 = vmatpush1.msra.mxu0 %v619
    %729 = vmatprep.subr.mxu0 0.0
    %730 = vmatpush1.msra.mxu0 0.0
    %731 = vmatprep.subr.mxu0 0.0
    %732 = vmatpush1.msra.mxu0 0.0
    %733 = vmatprep.subr.mxu0 0.0
    %734 = vmatpush1.msra.mxu0 0.0
    %735 = vmatprep.subr.mxu0 0.0
    %736 = vmatpush1.msra.mxu0 0.0
    %737 = vmatprep.subr.mxu0 0.0
    %738 = vmatpush1.msra.mxu0 0.0
    %739 = vmatprep.subr.mxu0 0.0
    %740 = vmatpush1.msra.mxu0 0.0
    %741 = vmatprep.subr.mxu0 0.0
    %742 = vmatpush1.msra.mxu0 0.0
    %743 = vmatprep.subr.mxu0 0.0
    %744 = vmatpush1.msra.mxu0 0.0
    %745 = vmatprep.subr.mxu0 0.0
    %746 = vmatpush1.msra.mxu0 0.0
    %747 = vmatprep.subr.mxu0 0.0
    %748 = vmatpush1.msra.mxu0 0.0
    %749 = vmatprep.subr.mxu0 0.0
    %750 = vmatpush1.msra.mxu0 0.0
    %751 = vmatprep.subr.mxu0 0.0
    %752 = vmatpush1.msra.mxu0 0.0
    %753 = vmatprep.subr.mxu0 0.0
    %754 = vmatpush1.msra.mxu0 0.0
    %755 = vmatprep.subr.mxu0 0.0
    %756 = vmatpush1.msra.mxu0 0.0
    %757 = vmatprep.subr.mxu0 0.0
    %758 = vmatpush1.msra.mxu0 0.0
    %759 = vmatprep.subr.mxu0 0.0
    %760 = vmatpush1.msra.mxu0 0.0
    %761 = vmatprep.mubr.f32.mxu0 0.0
    %762 = vmatmul.mubr.f32.gmra.mrb[0].mxu0 %v571
    %v763 = vpop.f32.mrb[0].mxu0
    %v764 = vadd.f32 %v694, %v763
    %v765 = vpop.f32.mrb[0].mxu0
    %766 = vdwg.mxu0
    %v767 = vmax.f32 %v764, 0.0
    %768 = vst [vmem:[#allocation7] sm:$0x3] %v767
    // Predicated region
    $region30: #{nba_forward.1} parent=1 // pred_check
      _
    $region31: #{nba_forward.1} parent=1 // pred_check_branch
      %770 = sbr.rel (0) target = $region33
    $region32: #{nba_forward.1} parent=1 // pred_region
      %s772 = ssub.s32 32, 32
      %773 = vsyncadd [#allocation4], %s772
      %s775 = sshll.u32 [#allocation7], 4
      %s776 = int_to_ptr.vmem [resolvable:$true] %s775
      %778 = dma.vmem_to_hbm [thread:$0]  %s776, 32, %s5, [#allocation4]
    $region33: #{nba_forward.1} parent=1 // pred_fallthru
      _
    // Predicated region
    $region34: #{nba_forward.1} parent=1 // pred_check
      _
    $region35: #{nba_forward.1} parent=1 // pred_check_branch
      %780 = sbr.rel (0) target = $region37
    $region36: #{nba_forward.1} parent=1 // pred_region
      %781 = dma.done [#allocation4], 32
    $region37: #{nba_forward.1} parent=1 // pred_fallthru
      _
    %782 = vsyncpa [#allocation3], 1
    %783 = vsyncpa [#allocation6], 1
    %784 = vsyncpa [#allocation4], 1

</llo_original>
